<compile_context>
chip_gen: v5e
topology: v5e:2x2
jax: 0.10.0
libtpu: 0.0.40
codegen_flags: <defaults>
</compile_context>

<pallas_src>
import functools

import jax
import jax.numpy as jnp
from jax.experimental import pallas as pl
from jax.experimental.pallas import tpu as pltpu


def _round_up(a: int, b: int) -> int:
    return ((a + b - 1) // b) * b


def _cdiv(a: int, b: int) -> int:
    return (a + b - 1) // b


def _linear_clamp_kernel_f32(x_ref, w_ref, b_ref, o_ref, *, min_value, max_value):
    """f32 output: accumulate directly into the resident output block."""
    k = pl.program_id(2)

    @pl.when(k == 0)
    def _():
        # Fold bias into accumulator init; broadcast_to avoids a full-tile add.
        o_ref[...] = jnp.broadcast_to(b_ref[...].astype(jnp.float32), o_ref.shape)

    # Canonical [TM,TK] . [TK,TN] contraction -> straight MXU push, no transpose.
    o_ref[...] += jnp.dot(x_ref[...], w_ref[...], preferred_element_type=jnp.float32)

    @pl.when(k == pl.num_programs(2) - 1)
    def _():
        y = o_ref[...]
        if min_value is not None:
            y = jnp.maximum(y, jnp.float32(min_value))
        if max_value is not None:
            y = jnp.minimum(y, jnp.float32(max_value))
        o_ref[...] = y


def _linear_clamp_kernel_acc(x_ref, w_ref, b_ref, o_ref, acc_ref, *, min_value, max_value):
    """Non-f32 output: use an f32 VMEM accumulator, cast in the epilogue."""
    k = pl.program_id(2)

    @pl.when(k == 0)
    def _():
        acc_ref[...] = jnp.broadcast_to(b_ref[...].astype(jnp.float32), acc_ref.shape)

    acc_ref[...] += jnp.dot(x_ref[...], w_ref[...], preferred_element_type=jnp.float32)

    @pl.when(k == pl.num_programs(2) - 1)
    def _():
        y = acc_ref[...]
        if min_value is not None:
            y = jnp.maximum(y, jnp.float32(min_value))
        if max_value is not None:
            y = jnp.minimum(y, jnp.float32(max_value))
        o_ref[...] = y.astype(o_ref.dtype)


def linear_clamp(x, weight, bias, min_value=None, max_value=None, *,
                 cast_inputs_to_bf16=False):
    """clamp(x @ weight.T + bias, min_value, max_value) as a tiled Pallas TPU kernel.

    x:      (B, in_features)
    weight: (out_features, in_features)   (nn.Linear layout)
    bias:   (out_features,)
    """
    if min_value is None and max_value is None:
        # torch.clamp requires at least one bound; mirror that contract.
        raise ValueError("At least one of 'min_value' or 'max_value' must not be None")

    B, K = x.shape
    N, K_w = weight.shape
    assert K_w == K, (weight.shape, x.shape)
    out_dtype = x.dtype

    # One-time transpose to [K, N] outside the grid: RHS contraction dim lands
    # on sublanes, which is what the MXU wants.
    w_t = weight.T

    # Tile sizes: big enough to hit the HBM roofline (512/512/1024 ~ 11 MiB
    # double-buffered f32 footprint), clamped to the (padded) problem size so
    # tiny shapes use a single small lane-dense tile.
    TM = min(512, _round_up(B, 8))
    TN = min(512, _round_up(N, 128))
    TK = min(1024, _round_up(K, 128))

    # v7x megacore: if the parallel (i, j) grid would be a single tile but the
    # batch is large enough to split, shrink TM so both TensorCores get work.
    if _cdiv(B, TM) * _cdiv(N, TN) == 1 and B >= 256:
        TM = _round_up(_cdiv(B, 2), 8)

    M_pad = _round_up(B, TM)
    N_pad = _round_up(N, TN)
    K_pad = _round_up(K, TK)

    # Only materialize padded copies when actually needed (avoids extra HBM
    # read+write of x / weight on aligned shapes). Zero-padded K contributes
    # nothing to the contraction; padded rows/cols are sliced off below.
    x_p = x if (M_pad == B and K_pad == K) else jnp.pad(
        x, ((0, M_pad - B), (0, K_pad - K)))
    w_p = w_t if (K_pad == K and N_pad == N) else jnp.pad(
        w_t, ((0, K_pad - K), (0, N_pad - N)))
    b_p = bias if N_pad == N else jnp.pad(bias, (0, N_pad - N))
    b_p = b_p.astype(jnp.float32).reshape(1, N_pad)

    if cast_inputs_to_bf16:
        # Native-MXU dtype on all generations; f32 accumulation/epilogue kept.
        x_p = x_p.astype(jnp.bfloat16)
        w_p = w_p.astype(jnp.bfloat16)

    grid = (M_pad // TM, N_pad // TN, K_pad // TK)

    use_acc_scratch = jnp.dtype(out_dtype) != jnp.dtype(jnp.float32)
    if use_acc_scratch:
        kernel = functools.partial(
            _linear_clamp_kernel_acc, min_value=min_value, max_value=max_value)
        scratch_shapes = [pltpu.VMEM((TM, TN), jnp.float32)]
    else:
        kernel = functools.partial(
            _linear_clamp_kernel_f32, min_value=min_value, max_value=max_value)
        scratch_shapes = []

    # Raise the scoped VMEM limit above the default (16 MiB on v5e / 32 MiB on
    # v6e, v7x) so the larger tiles never force spilling; cap at 64 MiB (v7x).
    in_bytes = jnp.dtype(x_p.dtype).itemsize
    out_bytes = jnp.dtype(out_dtype).itemsize
    footprint = (2 * (TM * TK + TK * TN) * in_bytes      # double-buffered inputs
                 + 2 * TN * 4                            # double-buffered bias
                 + 2 * TM * TN * out_bytes               # double-buffered output
                 + (TM * TN * 4 if use_acc_scratch else 0))
    vmem_limit = min(64 * 1024 * 1024, max(32 * 1024 * 1024, int(footprint * 1.5)))

    out_p = pl.pallas_call(
        kernel,
        out_shape=jax.ShapeDtypeStruct((M_pad, N_pad), out_dtype),
        grid_spec=pltpu.PrefetchScalarGridSpec(
            num_scalar_prefetch=0,
            grid=grid,
            in_specs=[
                pl.BlockSpec((TM, TK), lambda i, j, k: (i, k)),   # x tile
                pl.BlockSpec((TK, TN), lambda i, j, k: (k, j)),   # weight.T tile
                pl.BlockSpec((1, TN), lambda i, j, k: (0, j)),    # bias tile
            ],
            out_specs=pl.BlockSpec((TM, TN), lambda i, j, k: (i, j)),
            scratch_shapes=scratch_shapes,
        ),
        compiler_params=pltpu.CompilerParams(
            dimension_semantics=("parallel", "parallel", "arbitrary"),
            vmem_limit_bytes=vmem_limit,
        ),
    )(x_p, w_p, b_p)

    if M_pad == B and N_pad == N:
        return out_p
    return out_p[:B, :N]


if __name__ == "__main__":
    key = jax.random.PRNGKey(0)
    kx, kw, kb = jax.random.split(key, 3)

    in_features, out_features, batch = 2, 1, 2

    # Deterministic parameter init (matching nn.Linear(2, 1) shapes).
    bound = 1.0 / (in_features ** 0.5)
    weight = jax.random.uniform(
        kw, (out_features, in_features), jnp.float32, minval=-bound, maxval=bound
    )
    bias = jax.random.uniform(
        kb, (out_features,), jnp.float32, minval=-bound, maxval=bound
    )

    x = jax.random.normal(kx, (batch, in_features), dtype=jnp.float32)

    out = linear_clamp(x, weight, bias, min_value=-0.5, max_value=0.5)
    out = jax.block_until_ready(out)

    # Reference check in plain JAX.
    ref = jnp.clip(x @ weight.T + bias, -0.5, 0.5)
    assert out.shape == (batch, out_features), out.shape
    assert jnp.allclose(out, ref, atol=1e-5), (out, ref)

    # Single-bound clamps (matches torch.clamp semantics).
    out_min = jax.block_until_ready(linear_clamp(x, weight, bias, min_value=0.0))
    ref_min = jnp.maximum(x @ weight.T + bias, 0.0)
    assert jnp.allclose(out_min, ref_min, atol=1e-5), (out_min, ref_min)

    out_max = jax.block_until_ready(linear_clamp(x, weight, bias, max_value=0.25))
    ref_max = jnp.minimum(x @ weight.T + bias, 0.25)
    assert jnp.allclose(out_max, ref_max, atol=1e-5), (out_max, ref_max)

    # Optional bf16-input fast path (f32 accumulation); looser tolerance.
    out_bf16 = jax.block_until_ready(
        linear_clamp(x, weight, bias, min_value=-0.5, max_value=0.5,
                     cast_inputs_to_bf16=True))
    assert jnp.allclose(out_bf16, ref, atol=5e-2), (out_bf16, ref)

    print("KERNEL_OK")
</pallas_src>

<mosaic_0001>
module attributes {stable_mosaic.version = 11 : i64} {
  func.func @_linear_clamp_kernel_f32(%arg0: i32, %arg1: i32, %arg2: i32, %arg3: memref<8x128xf32, #tpu.memory_space<vmem>>, %arg4: memref<128x128xf32, #tpu.memory_space<vmem>>, %arg5: memref<1x128xf32, #tpu.memory_space<vmem>>, %arg6: memref<8x128xf32, #tpu.memory_space<vmem>>) attributes {dimension_semantics = [#tpu.dimension_semantics<parallel>, #tpu.dimension_semantics<parallel>, #tpu.dimension_semantics<arbitrary>], iteration_bounds = array<i64: 1, 1, 1>, scalar_prefetch = 0 : i64, scratch_operands = 0 : i64, tpu.core_type = #tpu.core_type<tc>, window_params = [{transform_indices = @transform_0, window_bounds = array<i64: 8, 128>}, {transform_indices = @transform_1, window_bounds = array<i64: 128, 128>}, {transform_indices = @transform_2, window_bounds = array<i64: 1, 128>}, {transform_indices = @transform_3, window_bounds = array<i64: 8, 128>}]} {
    %c0_i32 = arith.constant 0 : i32
    %0 = arith.cmpi eq, %arg2, %c0_i32 : i32
    %1 = arith.extui %0 : i1 to i32
    %c0_i32_0 = arith.constant 0 : i32
    %2 = arith.cmpi ne, %1, %c0_i32_0 : i32
    scf.if %2 {
      %c0_10 = arith.constant 0 : index
      %c0_11 = arith.constant 0 : index
      %12 = vector.load %arg5[%c0_10, %c0_11] : memref<1x128xf32, #tpu.memory_space<vmem>>, vector<1x128xf32>
      %13 = vector.shape_cast %12 : vector<1x128xf32> to vector<1x128xf32>
      %14 = vector.broadcast %13 : vector<1x128xf32> to vector<8x128xf32>
      %c0_12 = arith.constant 0 : index
      %c0_13 = arith.constant 0 : index
      %15 = vector.load %arg6[%c0_12, %c0_13] : memref<8x128xf32, #tpu.memory_space<vmem>>, vector<8x128xf32>
      tpu.vector_store %arg6[%c0_12, %c0_13], %14 {strides = array<i32>} : memref<8x128xf32, #tpu.memory_space<vmem>>, vector<8x128xf32>,
    } else {
    }
    %c0 = arith.constant 0 : index
    %c0_1 = arith.constant 0 : index
    %3 = vector.load %arg6[%c0, %c0_1] : memref<8x128xf32, #tpu.memory_space<vmem>>, vector<8x128xf32>
    %c0_2 = arith.constant 0 : index
    %c0_3 = arith.constant 0 : index
    %4 = vector.load %arg3[%c0_2, %c0_3] : memref<8x128xf32, #tpu.memory_space<vmem>>, vector<8x128xf32>
    %c0_4 = arith.constant 0 : index
    %c0_5 = arith.constant 0 : index
    %5 = vector.load %arg4[%c0_4, %c0_5] : memref<128x128xf32, #tpu.memory_space<vmem>>, vector<128x128xf32>
    %cst = arith.constant dense<0.000000e+00> : vector<8x128xf32>
    %6 = tpu.matmul %4, %5, %cst {dimension_numbers = #tpu.dot_dimension_numbers<[1], [0], [0], [1], [0, 0, 1, 1], [], []>} : vector<8x128xf32>, vector<128x128xf32>, vector<8x128xf32> -> vector<8x128xf32>
    %7 = arith.addf %3, %6 : vector<8x128xf32>
    %c0_6 = arith.constant 0 : index
    %c0_7 = arith.constant 0 : index
    %8 = vector.load %arg6[%c0_6, %c0_7] : memref<8x128xf32, #tpu.memory_space<vmem>>, vector<8x128xf32>
    tpu.vector_store %arg6[%c0_6, %c0_7], %7 {strides = array<i32>} : memref<8x128xf32, #tpu.memory_space<vmem>>, vector<8x128xf32>,
    %c0_i32_8 = arith.constant 0 : i32
    %9 = arith.cmpi eq, %arg2, %c0_i32_8 : i32
    %10 = arith.extui %9 : i1 to i32
    %c0_i32_9 = arith.constant 0 : i32
    %11 = arith.cmpi ne, %10, %c0_i32_9 : i32
    scf.if %11 {
      %c0_10 = arith.constant 0 : index
      %c0_11 = arith.constant 0 : index
      %12 = vector.load %arg6[%c0_10, %c0_11] : memref<8x128xf32, #tpu.memory_space<vmem>>, vector<8x128xf32>
      %cst_12 = arith.constant -5.000000e-01 : f32
      %13 = vector.broadcast %cst_12 : f32 to vector<8x128xf32>
      %14 = arith.maximumf %12, %13 : vector<8x128xf32>
      %cst_13 = arith.constant 5.000000e-01 : f32
      %15 = vector.broadcast %cst_13 : f32 to vector<8x128xf32>
      %16 = arith.minimumf %14, %15 : vector<8x128xf32>
      %c0_14 = arith.constant 0 : index
      %c0_15 = arith.constant 0 : index
      %17 = vector.load %arg6[%c0_14, %c0_15] : memref<8x128xf32, #tpu.memory_space<vmem>>, vector<8x128xf32>
      tpu.vector_store %arg6[%c0_14, %c0_15], %16 {strides = array<i32>} : memref<8x128xf32, #tpu.memory_space<vmem>>, vector<8x128xf32>,
    } else {
    }
    return
  }
  func.func @transform_0(%arg0: i32, %arg1: i32, %arg2: i32) -> (i32, i32) {
    %c0_i32 = arith.constant 0 : i32
    return %arg0, %arg2 : i32, i32
  }
  func.func @transform_1(%arg0: i32, %arg1: i32, %arg2: i32) -> (i32, i32) {
    %c0_i32 = arith.constant 0 : i32
    return %arg2, %arg1 : i32, i32
  }
  func.func @transform_2(%arg0: i32, %arg1: i32, %arg2: i32) -> (i32, i32) {
    %c0_i32 = arith.constant 0 : i32
    %c0_i32_0 = arith.constant 0 : i32
    return %c0_i32, %arg1 : i32, i32
  }
  func.func @transform_3(%arg0: i32, %arg1: i32, %arg2: i32) -> (i32, i32) {
    %c0_i32 = arith.constant 0 : i32
    return %arg0, %arg1 : i32, i32
  }
}

</mosaic_0001>

<llo_original>
// kernel: tpu_custom_call.1
$region0: #{tpu_custom_call.1}
  #allocation0 [shape = 'u32[]', space=smem, size = 0x4, offset = 0x4, fixed_abs, tag = 'smem constant byte address 0x4 - core index']
  #allocation1 [shape = 'u32[72,128]{1,0:T(1,128)}', space=vmem, size = 0x9000, scoped, tag = 'internal scratch']
  %s0 = inlined_call_operand.hbm [shape: f32[8,128], index: 0, kind: input, shape index: {}]
  %s1 = inlined_call_operand.hbm [shape: f32[128,128], index: 1, kind: input, shape index: {}]
  %s2 = inlined_call_operand.vmem [shape: f32[1,128], index: 2, kind: input, shape index: {}]
  %s3 = inlined_call_operand.hbm [shape: f32[8,128], index: 3, kind: output, shape index: {}]
  %s4 = sld [smem:[#allocation0]]
  $region38: #{tpu_custom_call.1} parent=0
    _
  %s6 = ssub.s32 1, %s4
  %s7 = scalar_select 0, %s6, %s4
  $region1: #{tpu_custom_call.1} parent=0
    #allocation2 [shape = 'u8[4096]{0}', space=vmem, size = 0x1000, scoped, tag = 'input window, operand 0, single buffered']
    #allocation3 [shape = 's32[1]{0}', space=sflag, size = 0x4, scoped, tag = 'scoped memory for tpu_custom_call.1']
    #allocation4 [shape = 's32[1]{0}', space=sflag, size = 0x4, scoped, tag = 'scoped memory for tpu_custom_call.1']
    #allocation5 [shape = 'u8[65536]{0}', space=vmem, size = 0x10000, scoped, tag = 'input window, operand 1, single buffered']
    #allocation6 [shape = 's32[1]{0}', space=sflag, size = 0x4, scoped, tag = 'scoped memory for tpu_custom_call.1']
    #allocation7 [shape = 'u8[4096]{0}', space=vmem, size = 0x1000, scoped, tag = 'output window, operand 0, single buffered']
    %8 = vsyncpa [#allocation3], 0
    %9 = vsyncpa [#allocation6], 0
    %10 = vsyncpa [#allocation4], 0
    // Predicated region
    $region2: #{tpu_custom_call.1} parent=1 // pred_check
      _
    $region3: #{tpu_custom_call.1} parent=1 // pred_check_branch
      %12 = sbr.rel (0) target = $region5
    $region4: #{tpu_custom_call.1} parent=1 // pred_region
      %14 = vsyncadd [#allocation3], 0
      %s16 = sshll.u32 %s0, 4
      %s17 = int_to_ptr.hbm [resolvable:$true] %s16
      %s18 = sshll.u32 [#allocation2], 4
      %s19 = int_to_ptr.vmem [resolvable:$true] %s18
      %21 = dma.hbm_to_vmem [thread:$0]  %s17, 128, %s19, [#allocation3]
    $region5: #{tpu_custom_call.1} parent=1 // pred_fallthru
      _
    // Predicated region
    $region6: #{tpu_custom_call.1} parent=1 // pred_check
      _
    $region7: #{tpu_custom_call.1} parent=1 // pred_check_branch
      %23 = sbr.rel (0) target = $region9
    $region8: #{tpu_custom_call.1} parent=1 // pred_region
      %25 = vsyncadd [#allocation6], 0
      %s26 = sshll.u32 %s1, 4
      %s27 = int_to_ptr.hbm [resolvable:$true] %s26
      %s28 = sshll.u32 [#allocation5], 4
      %s29 = int_to_ptr.vmem [resolvable:$true] %s28
      %34 = dma.hbm_to_vmem [thread:$0]  %s27, 2048, %s29, [#allocation6], 128, 128, 8
    $region9: #{tpu_custom_call.1} parent=1 // pred_fallthru
      _
    // Predicated region
    $region10: #{tpu_custom_call.1} parent=1 // pred_check
      _
    $region11: #{tpu_custom_call.1} parent=1 // pred_check_branch
      %36 = sbr.rel (0) target = $region13
    $region12: #{tpu_custom_call.1} parent=1 // pred_region
      _
    $region13: #{tpu_custom_call.1} parent=1 // pred_fallthru
      _
    // Predicated region
    $region14: #{tpu_custom_call.1} parent=1 // pred_check
      _
    $region15: #{tpu_custom_call.1} parent=1 // pred_check_branch
      %38 = sbr.rel (0) target = $region17
    $region16: #{tpu_custom_call.1} parent=1 // pred_region
      %40 = dma.done [#allocation3], 128
    $region17: #{tpu_custom_call.1} parent=1 // pred_fallthru
      _
    // Predicated region
    $region18: #{tpu_custom_call.1} parent=1 // pred_check
      _
    $region19: #{tpu_custom_call.1} parent=1 // pred_check_branch
      %42 = sbr.rel (0) target = $region21
    $region20: #{tpu_custom_call.1} parent=1 // pred_region
      %44 = dma.done [#allocation6], 2048
    $region21: #{tpu_custom_call.1} parent=1 // pred_fallthru
      _
    %p45 = scmp.eq.s32.totalorder 0, 0
    // Predicated region
    $region22: #{tpu_custom_call.1} parent=1 // pred_check
      %p46 = pneg %p45
    $region23: #{tpu_custom_call.1} parent=1 // pred_check_branch
      %48 = sbr.rel (%p46) target = $region25
    $region24: #{tpu_custom_call.1} parent=1 // pred_region
      %v49 = vld [vmem:[%s2] sm:$0x1]
      %v51 = vperm.slane %v49, 0
      %53 = vst [vmem:[#allocation7] sm:$0xff] %v51
    $region25: #{tpu_custom_call.1} parent=1 // pred_fallthru
      _
    %v54 = vld [vmem:[#allocation7] sm:$0xff]
    %v55 = vld [vmem:[#allocation2] sm:$0xff]
    %v56 = vld [vmem:[#allocation5] sm:$0xff]
    %v57 = vld [vmem:[#allocation5 + $0x8] sm:$0xff]
    %v58 = vld [vmem:[#allocation5 + $0x10] sm:$0xff]
    %v59 = vld [vmem:[#allocation5 + $0x18] sm:$0xff]
    %v60 = vld [vmem:[#allocation5 + $0x20] sm:$0xff]
    %v61 = vld [vmem:[#allocation5 + $0x28] sm:$0xff]
    %v62 = vld [vmem:[#allocation5 + $0x30] sm:$0xff]
    %v63 = vld [vmem:[#allocation5 + $0x38] sm:$0xff]
    %v64 = vld [vmem:[#allocation5 + $0x40] sm:$0xff]
    %v65 = vld [vmem:[#allocation5 + $0x48] sm:$0xff]
    %v66 = vld [vmem:[#allocation5 + $0x50] sm:$0xff]
    %v67 = vld [vmem:[#allocation5 + $0x58] sm:$0xff]
    %v68 = vld [vmem:[#allocation5 + $0x60] sm:$0xff]
    %v69 = vld [vmem:[#allocation5 + $0x68] sm:$0xff]
    %v70 = vld [vmem:[#allocation5 + $0x70] sm:$0xff]
    %v71 = vld [vmem:[#allocation5 + $0x78] sm:$0xff]
    %72 = vmatpush.msra.mxu0 %v71
    %73 = vmatpush.msra.mxu0 %v70
    %74 = vmatpush.msra.mxu0 %v69
    %75 = vmatpush.msra.mxu0 %v68
    %76 = vmatpush.msra.mxu0 %v67
    %77 = vmatpush.msra.mxu0 %v66
    %78 = vmatpush.msra.mxu0 %v65
    %79 = vmatpush.msra.mxu0 %v64
    %80 = vmatpush.msra.mxu0 %v63
    %81 = vmatpush.msra.mxu0 %v62
    %82 = vmatpush.msra.mxu0 %v61
    %83 = vmatpush.msra.mxu0 %v60
    %84 = vmatpush.msra.mxu0 %v59
    %85 = vmatpush.msra.mxu0 %v58
    %86 = vmatpush.msra.mxu0 %v57
    %87 = vmatpush.msra.mxu0 %v56
    %88 = vmatmul.f32.gmra.mxu0 %v55
    %v89 = vpop.f32.mrf.mxu0
    %v90 = vadd.f32 0.0, %v89
    %91 = vdwg.mxu0
    %v92 = vadd.f32 %v54, %v90
    %93 = vst [vmem:[#allocation7] sm:$0xff] %v92
    // Predicated region
    $region26: #{tpu_custom_call.1} parent=1 // pred_check
      %p94 = pneg %p45
    $region27: #{tpu_custom_call.1} parent=1 // pred_check_branch
      %96 = sbr.rel (%p94) target = $region29
    $region28: #{tpu_custom_call.1} parent=1 // pred_region
      %v97 = vld [vmem:[#allocation7] sm:$0xff]
      %v98 = vmax.f32 %v97, -0.5
      %v99 = vmin.f32 %v98, 0.5
      %100 = vst [vmem:[#allocation7] sm:$0xff] %v99
    $region29: #{tpu_custom_call.1} parent=1 // pred_fallthru
      _
    // Predicated region
    $region30: #{tpu_custom_call.1} parent=1 // pred_check
      _
    $region31: #{tpu_custom_call.1} parent=1 // pred_check_branch
      %102 = sbr.rel (0) target = $region33
    $region32: #{tpu_custom_call.1} parent=1 // pred_region
      %104 = vsyncadd [#allocation4], 0
      %s106 = sshll.u32 [#allocation7], 4
      %s107 = int_to_ptr.vmem [resolvable:$true] %s106
      %s108 = sshll.u32 %s3, 4
      %s109 = int_to_ptr.hbm [resolvable:$true] %s108
      %111 = dma.vmem_to_hbm [thread:$0]  %s107, 128, %s109, [#allocation4]
    $region33: #{tpu_custom_call.1} parent=1 // pred_fallthru
      _
    // Predicated region
    $region34: #{tpu_custom_call.1} parent=1 // pred_check
      _
    $region35: #{tpu_custom_call.1} parent=1 // pred_check_branch
      %113 = sbr.rel (0) target = $region37
    $region36: #{tpu_custom_call.1} parent=1 // pred_region
      %115 = dma.done [#allocation4], 128
    $region37: #{tpu_custom_call.1} parent=1 // pred_fallthru
      _
    %116 = vsyncpa [#allocation3], 1
    %117 = vsyncpa [#allocation6], 1
    %118 = vsyncpa [#allocation4], 1

</llo_original>
